<compile_context>
chip_gen: v7x
topology: tpu7x:2x2x1
jax: 0.10.0
libtpu: 0.0.40
codegen_flags: <defaults>
</compile_context>

<pallas_src>
import numpy as np
import jax
import jax.numpy as jnp
from jax.experimental import pallas as pl
from jax.experimental.pallas import tpu as pltpu

_DEG_PER_RAD = np.float32(180.0 / np.pi)

_SOBEL_X = np.array([[-1.0, 0.0, 1.0],
                     [-2.0, 0.0, 2.0],
                     [-1.0, 0.0, 1.0]], dtype=np.float32)
_SOBEL_Y = np.array([[-1.0, -2.0, -1.0],
                     [0.0, 0.0, 0.0],
                     [1.0, 2.0, 1.0]], dtype=np.float32)


def _round_up(x, m):
    return ((x + m - 1) // m) * m


def _choose_row_tile(Ho, lanes, n_groups):
    """Output-row tile: multiple of 8 (sublane).  Sized so the ~6 live
    (TH, lanes) f32 intermediates of the deduped kernel stay within the
    64-entry vreg file (<= ~8 vregs each, i.e. TH*lanes <= 8192) while being
    large enough to amortize the ~0.35us per-grid-step overhead.  When there
    is only one batch group, force >= 2 row tiles so both v7x TensorCores
    receive parallel grid steps."""
    Ho8 = _round_up(Ho, 8)
    cap = max(8, min(128, ((8192 // lanes) // 8) * 8))
    th = min(Ho8, cap)
    if n_groups == 1 and Ho8 >= 16:
        th = min(th, _round_up(Ho8 // 2, 8))
    return max(8, th)


def _make_sobel_orientation_kernel(TH, LANES):
    """Kernel for one (batch-group, row-tile) grid step.

    x_ref : (H_pad, LANES) VMEM -- padded, lane-packed image (resident per g)
    o_ref : (TH, LANES)    VMEM -- orientation output tile (degrees)
    """

    def kernel(x_ref, o_ref):
        row0 = pl.multiple_of(pl.program_id(1) * TH, TH)

        # Vertical pass, shared by gx and gy: three row-shifted views.
        # (Kept as direct dynamic-start loads; the sublane-aligned slab+roll
        # variant is a modest-win micro-opt per the bundle-level review.)
        r0 = x_ref[pl.ds(row0, TH), :]
        r1 = x_ref[pl.ds(row0 + 1, TH), :]
        r2 = x_ref[pl.ds(row0 + 2, TH), :]
        smooth = (r0 + r2) + (r1 + r1)        # [1, 2, 1] vertical smoothing
        diff = r2 - r0                        # [-1, 0, 1] vertical derivative

        # Horizontal pass on the XLU: output col j reads input col j+d, i.e.
        # a lane rotation left by d; wrapped / cross-segment columns only land
        # in discarded padding columns of each lane segment.
        gx = pltpu.roll(smooth, LANES - 2, axis=1) - smooth            # [-1,0,1]
        d1 = pltpu.roll(diff, LANES - 1, axis=1)
        d2 = pltpu.roll(diff, LANES - 2, axis=1)
        gy = (diff + d2) + (d1 + d1)                                    # [1,2,1]

        o_ref[...] = jnp.arctan2(gy, gx) * _DEG_PER_RAD

    return kernel


def gradient_net_forward(x, weight_x, weight_y):
    N, C, H, W = x.shape
    assert C == 1, "Gradient_Net conv weights have in_channels == 1"
    OC = weight_x.shape[0]
    Ho, Wo = H - 2, W - 2

    # Specialization guard: every output channel of Gradient_Net carries the
    # same fixed, non-trainable Sobel kernel (set in __init__), so gx/gy/atan2
    # are computed once and the taps are baked into the kernel.
    wx = np.asarray(weight_x)
    wy = np.asarray(weight_y)
    if not (wx.shape == (OC, 1, 3, 3) and wy.shape == (OC, 1, 3, 3)
            and np.array_equal(wx, np.broadcast_to(_SOBEL_X, wx.shape))
            and np.array_equal(wy, np.broadcast_to(_SOBEL_Y, wy.shape))):
        # TODO(synk): general per-channel 3x3 weights would need the
        # non-specialized per-OC accumulation path; Gradient_Net never
        # constructs such weights.
        raise NotImplementedError(
            "Pallas kernel is specialized for Gradient_Net's fixed Sobel weights")

    # Lane packing: for narrow images (W <= 64) pack several batch elements
    # side by side along the 128-lane axis.  Each image owns a W-wide lane
    # segment; its valid output columns are [0, Wo) so roll spill-over from
    # the neighbouring segment only lands in discarded columns.
    K = max(1, min(N, 128 // W)) if W <= 64 else 1
    G = -(-N // K)                        # batch groups after packing
    LANES = _round_up(K * W, 128)         # lane-dense padded width

    TH = _choose_row_tile(Ho, LANES, G)
    Ho_pad = _round_up(Ho, TH)
    H_pad = Ho_pad + 2
    HT = Ho_pad // TH

    xs = x.astype(jnp.float32).reshape(N, H, W)
    xs = jnp.pad(xs, ((0, G * K - N), (0, 0), (0, 0)))
    xs = xs.reshape(G, K, H, W).transpose(0, 2, 1, 3).reshape(G, H, K * W)
    xp = jnp.pad(xs, ((0, 0), (0, H_pad - H), (0, LANES - K * W)))

    # Explicit VMEM budget, capped at 80% of physical per-core VMEM so the
    # request never exceeds v7x's 64 MiB (v5e/v6e have 128 MiB).
    x_blk = H_pad * LANES * 4
    o_blk = TH * LANES * 4
    est = 2 * x_blk + 2 * o_blk + 8 * o_blk     # dbuf'd blocks + live temps
    try:
        vmem_phys = int(pltpu.get_tpu_info().vmem_capacity_bytes)
    except Exception:
        vmem_phys = 64 * 2**20                  # conservative (v7x per-TC)
    vmem_limit = int(min(int(0.8 * vmem_phys), max(32 * 2**20, 2 * est)))

    out = pl.pallas_call(
        _make_sobel_orientation_kernel(TH, LANES),
        out_shape=jax.ShapeDtypeStruct((G, Ho_pad, LANES), jnp.float32),
        grid_spec=pltpu.PrefetchScalarGridSpec(
            num_scalar_prefetch=0,
            grid=(G, HT),
            in_specs=[
                # Full padded (packed) image per batch group; the index_map is
                # constant in t, so it is DMA'd once per group and stays
                # resident across all row tiles.
                pl.BlockSpec((pl.Squeezed(), H_pad, LANES),
                             lambda g, t: (g, 0, 0)),
            ],
            out_specs=pl.BlockSpec((pl.Squeezed(), TH, LANES),
                                   lambda g, t: (g, t, 0)),
        ),
        compiler_params=pltpu.CompilerParams(
            dimension_semantics=("parallel", "parallel"),
            vmem_limit_bytes=vmem_limit),
    )(xp)

    # Unpack lane segments back to (N, Ho, Wo) and broadcast across the OC
    # axis (all channels are identical by construction).  This is the single
    # HBM materialization of the OC-replicated result; consumers that accept
    # the deduped padded layout could skip it entirely.
    out = out[:, :, :K * W].reshape(G, Ho_pad, K, W)
    out = out.transpose(0, 2, 1, 3).reshape(G * K, Ho_pad, W)
    orient = out[:N, :Ho, :Wo]
    return jnp.broadcast_to(orient[:, None, :, :], (N, OC, Ho, Wo))


def _reference(x, wx, wy):
    dn = jax.lax.conv_dimension_numbers(x.shape, wx.shape,
                                        ("NCHW", "OIHW", "NCHW"))
    gx = jax.lax.conv_general_dilated(x, wx, (1, 1), "VALID",
                                      dimension_numbers=dn)
    gy = jax.lax.conv_general_dilated(x, wy, (1, 1), "VALID",
                                      dimension_numbers=dn)
    return jnp.arctan2(gy, gx) * (180.0 / np.pi)


def make_weights(batchsize):
    kernel_x = jnp.array([[-1.0, 0.0, 1.0],
                          [-2.0, 0.0, 2.0],
                          [-1.0, 0.0, 1.0]], dtype=jnp.float32)
    kernel_y = jnp.array([[-1.0, -2.0, -1.0],
                          [0.0, 0.0, 0.0],
                          [1.0, 2.0, 1.0]], dtype=jnp.float32)
    weight_x = jnp.broadcast_to(kernel_x[None, None], (batchsize, 1, 3, 3))
    weight_y = jnp.broadcast_to(kernel_y[None, None], (batchsize, 1, 3, 3))
    return jnp.asarray(weight_x), jnp.asarray(weight_y)


if __name__ == "__main__":
    batchsize = 2
    H = W = 16

    key = jax.random.PRNGKey(0)
    x = jax.random.normal(key, (batchsize, 1, H, W), dtype=jnp.float32)
    weight_x, weight_y = make_weights(batchsize)

    out = gradient_net_forward(x, weight_x, weight_y)
    out = jax.block_until_ready(out)

    ref = _reference(x, weight_x, weight_y)
    assert out.shape == (batchsize, batchsize, H - 2, W - 2), out.shape
    np.testing.assert_allclose(np.asarray(out), np.asarray(ref),
                               rtol=1e-3, atol=1e-3)

    print("KERNEL_OK")
</pallas_src>

<mosaic_0001>
module attributes {stable_mosaic.version = 11 : i64} {
  func.func @kernel(%arg0: i32, %arg1: i32, %arg2: memref<1x18x128xf32, #tpu.memory_space<vmem>>, %arg3: memref<1x8x128xf32, #tpu.memory_space<vmem>>) attributes {dimension_semantics = [#tpu.dimension_semantics<parallel>, #tpu.dimension_semantics<parallel>], iteration_bounds = array<i64: 1, 2>, scalar_prefetch = 0 : i64, scratch_operands = 0 : i64, tpu.core_type = #tpu.core_type<tc>, window_params = [{transform_indices = @transform_0, window_bounds = array<i64: 1, 18, 128>}, {transform_indices = @transform_1, window_bounds = array<i64: 1, 8, 128>}]} {
    %c8_i32 = arith.constant 8 : i32
    %0 = arith.muli %arg1, %c8_i32 : i32
    %1 = tpu.assume_multiple %0, 8 : i32
    %c0 = arith.constant 0 : index
    %2 = arith.index_cast %1 : i32 to index
    %c0_0 = arith.constant 0 : index
    %3 = vector.load %arg2[%c0, %2, %c0_0] : memref<1x18x128xf32, #tpu.memory_space<vmem>>, vector<1x8x128xf32>
    %4 = vector.shape_cast %3 : vector<1x8x128xf32> to vector<8x128xf32>
    %c1_i32 = arith.constant 1 : i32
    %5 = arith.addi %1, %c1_i32 : i32
    %c0_1 = arith.constant 0 : index
    %6 = arith.index_cast %5 : i32 to index
    %c0_2 = arith.constant 0 : index
    %7 = vector.load %arg2[%c0_1, %6, %c0_2] : memref<1x18x128xf32, #tpu.memory_space<vmem>>, vector<1x8x128xf32>
    %8 = vector.shape_cast %7 : vector<1x8x128xf32> to vector<8x128xf32>
    %c2_i32 = arith.constant 2 : i32
    %9 = arith.addi %1, %c2_i32 : i32
    %c0_3 = arith.constant 0 : index
    %10 = arith.index_cast %9 : i32 to index
    %c0_4 = arith.constant 0 : index
    %11 = vector.load %arg2[%c0_3, %10, %c0_4] : memref<1x18x128xf32, #tpu.memory_space<vmem>>, vector<1x8x128xf32>
    %12 = vector.shape_cast %11 : vector<1x8x128xf32> to vector<8x128xf32>
    %13 = arith.addf %4, %12 : vector<8x128xf32>
    %14 = arith.addf %8, %8 : vector<8x128xf32>
    %15 = arith.addf %13, %14 : vector<8x128xf32>
    %16 = arith.subf %12, %4 : vector<8x128xf32>
    %c126_i32 = arith.constant 126 : i32
    %17 = tpu.dynamic_rotate %15 by %c126_i32 dim 1 : vector<8x128xf32>, i32 -> vector<8x128xf32>
    %18 = arith.subf %17, %15 : vector<8x128xf32>
    %c127_i32 = arith.constant 127 : i32
    %19 = tpu.dynamic_rotate %16 by %c127_i32 dim 1 : vector<8x128xf32>, i32 -> vector<8x128xf32>
    %c126_i32_5 = arith.constant 126 : i32
    %20 = tpu.dynamic_rotate %16 by %c126_i32_5 dim 1 : vector<8x128xf32>, i32 -> vector<8x128xf32>
    %21 = arith.addf %16, %20 : vector<8x128xf32>
    %22 = arith.addf %19, %19 : vector<8x128xf32>
    %23 = arith.addf %21, %22 : vector<8x128xf32>
    %24 = math.atan2 %23, %18 : vector<8x128xf32>
    %cst = arith.constant 57.2957802 : f32
    %25 = vector.broadcast %cst : f32 to vector<8x128xf32>
    %26 = arith.mulf %24, %25 : vector<8x128xf32>
    %c0_6 = arith.constant 0 : index
    %c0_7 = arith.constant 0 : index
    %c0_8 = arith.constant 0 : index
    %27 = vector.load %arg3[%c0_6, %c0_7, %c0_8] : memref<1x8x128xf32, #tpu.memory_space<vmem>>, vector<1x8x128xf32>
    %28 = vector.shape_cast %27 : vector<1x8x128xf32> to vector<8x128xf32>
    %29 = vector.shape_cast %26 : vector<8x128xf32> to vector<1x8x128xf32>
    tpu.vector_store %arg3[%c0_6, %c0_7, %c0_8], %29 {strides = array<i32>} : memref<1x8x128xf32, #tpu.memory_space<vmem>>, vector<1x8x128xf32>,
    return
  }
  func.func @transform_0(%arg0: i32, %arg1: i32) -> (i32, i32, i32) {
    %c0_i32 = arith.constant 0 : i32
    %c0_i32_0 = arith.constant 0 : i32
    %c0_i32_1 = arith.constant 0 : i32
    return %arg0, %c0_i32, %c0_i32_0 : i32, i32, i32
  }
  func.func @transform_1(%arg0: i32, %arg1: i32) -> (i32, i32, i32) {
    %c0_i32 = arith.constant 0 : i32
    %c0_i32_0 = arith.constant 0 : i32
    return %arg0, %arg1, %c0_i32 : i32, i32, i32
  }
}

</mosaic_0001>

<llo_original>
// kernel: tpu_custom_call.1
$region0: #{tpu_custom_call.1}
  #allocation0 [shape = 'u32[]', space=smem, size = 0x4, offset = 0x4, fixed_abs, tag = 'smem constant byte address 0x4 - core index']
  #allocation1 [shape = 'u32[144,128]{1,0:T(1,128)}', space=vmem, size = 0x12000, scoped, tag = 'internal scratch']
  %s0 = inlined_call_operand.vmem [shape: f32[1,18,128], index: 0, kind: input, shape index: {}]
  %s1 = inlined_call_operand.hbm [shape: f32[1,16,128], index: 1, kind: output, shape index: {}]
  %s2 = sld [smem:[#allocation0]]
  $region37: #{tpu_custom_call.1} parent=0
    _
  %s4 = ssub.s32 1, %s2
  %s5 = scalar_select 0, %s4, %s2
  $region1: #{tpu_custom_call.1} parent=0
    #allocation2 [shape = 'u8[8192]{0}', space=vmem, size = 0x2000, scoped, tag = 'output window, operand 0']
    #allocation3 [shape = 's32[2]{0}', space=sflag, size = 0x8, scoped, tag = 'scoped memory for tpu_custom_call.1']
    %6 = vsyncpa [#allocation3], 0
    %s7 = scalar_lea.sflag [#allocation3], 1
    %8 = vsyncpa %s7, 0
    loop: start=0, step=1, limit=4
    $region2: #{tpu_custom_call.1} parent=1 // loop_pre_header
      _
    $region3: #{tpu_custom_call.1} parent=1 // loop_header
      %s10 = sphi 0, %s14
      %p11 = scmp.ge.s32.totalorder %s10, 4
      %s17 = sphi 0, %s29
      %s18 = sphi 0, %s25
      %s19 = sphi 0, %s17
      %s20 = sphi 0, %s18
      %s21 = sphi 0, %s19
      %s22 = sphi 0, %s20
      %s32 = sphi 0, %s34
      %s35 = sphi 0, %s32
      %s36 = sphi 0, %s35
      %s52 = sphi 0, %s36
      %s60 = sphi 0, %s62
      %s63 = sphi 0, %s60
      %s64 = sphi 0, %s63
      %s80 = sphi 0, %s64
    $region4: #{tpu_custom_call.1} parent=1 // loop_header_branch
      %13 = sbr.rel (%p11) target = $region8
    $region5: #{tpu_custom_call.1} parent=1 // loop_body
      %s15 = ssub.s32 %s10, 1
      %s16 = ssub.s32 %s10, 2
      %s23 = sadd.s32 1, %s18
      %p24 = scmp.ge.s32.totalorder %s23, 2
      %s25 = scalar_select %p24, 0, %s23
      %s26 = sadd.s32 1, %s17
      %s27 = scalar_select %p24, %s26, %s17
      %p28 = scmp.ge.s32.totalorder %s27, 1
      %s29 = scalar_select %p28, 0, %s27
      %s30 = ssub.s32 %s17, %s29
      %p31 = scmp.eq.s32.totalorder %s30, 0
      %s33 = sadd.s32 %s32, 1
      %s34 = scalar_select %p31, %s32, %s33
      %p37 = pneg %p31
      %p38 = scmp.eq.s32.totalorder %s10, 1
      %p39 = por %p37, %p38
      %p40 = scmp.ne.s32.totalorder %s32, %s35
      %p41 = scmp.eq.s32.totalorder %s10, 0
      %p42 = por %p40, %p41
      %p43 = scmp.ne.s32.totalorder %s32, %s35
      %p44 = scmp.eq.s32.totalorder %s15, 1
      %p45 = por %p43, %p44
      %p46 = scmp.ne.s32.totalorder %s35, %s36
      %p47 = scmp.eq.s32.totalorder %s15, 0
      %p48 = por %p46, %p47
      %p49 = scmp.ne.s32.totalorder %s35, %s36
      %p50 = scmp.eq.s32.totalorder %s16, 1
      %p51 = por %p49, %p50
      %p53 = scmp.ne.s32.totalorder %s36, %s52
      %p54 = scmp.eq.s32.totalorder %s16, 0
      %p55 = por %p53, %p54
      %s56 = ssub.s32 %s17, %s29
      %s57 = ssub.s32 %s18, %s25
      %s58 = sor.u32 %s56, %s57
      %p59 = scmp.eq.s32.totalorder %s58, 0
      %s61 = sadd.s32 %s60, 1
      %s62 = scalar_select %p59, %s60, %s61
      %p65 = pneg %p59
      %p66 = scmp.eq.s32.totalorder %s10, 1
      %p67 = por %p65, %p66
      %p68 = scmp.ne.s32.totalorder %s60, %s63
      %p69 = scmp.eq.s32.totalorder %s10, 0
      %p70 = por %p68, %p69
      %p71 = scmp.ne.s32.totalorder %s60, %s63
      %p72 = scmp.eq.s32.totalorder %s15, 1
      %p73 = por %p71, %p72
      %p74 = scmp.ne.s32.totalorder %s63, %s64
      %p75 = scmp.eq.s32.totalorder %s15, 0
      %p76 = por %p74, %p75
      %p77 = scmp.ne.s32.totalorder %s63, %s64
      %p78 = scmp.eq.s32.totalorder %s16, 1
      %p79 = por %p77, %p78
      %p81 = scmp.ne.s32.totalorder %s64, %s80
      %p82 = scmp.eq.s32.totalorder %s16, 0
      %p83 = por %p81, %p82
      %p84 = scmp.le.s32.totalorder 1, %s10
      %p85 = scmp.lt.s32.totalorder %s10, 3
      %p86 = pnand %p84, %p85
      %p87 = pneg %p86
      // Predicated region
      $region9: #{tpu_custom_call.1} parent=5 // pred_check
        _
      $region10: #{tpu_custom_call.1} parent=5 // pred_check_branch
        %89 = sbr.rel (%p86) target = $region12
      $region11: #{tpu_custom_call.1} parent=5 // pred_region
        %s90 = ssub.s32 %s10, 1
        // Predicated region
        $region13: #{tpu_custom_call.1} parent=11 // pred_check
          %p91 = pneg %p48
        $region14: #{tpu_custom_call.1} parent=11 // pred_check_branch
          %93 = sbr.rel (%p91) target = $region16
        $region15: #{tpu_custom_call.1} parent=11 // pred_region
          %p94 = scmp.lt.s32.totalorder %s19, 0
          %s95 = scalar_select %p94, %s19, 0
          %s96 = smul.addr %s95, 3
          %s97 = smul.addr %s96, 8
          %s98 = scalar_lea.vmem %s0, %s97
        $region16: #{tpu_custom_call.1} parent=11 // pred_fallthru
          _
      $region12: #{tpu_custom_call.1} parent=5 // pred_fallthru
        _
      %p99 = scmp.lt.s32.totalorder %s10, 2
      // Predicated region
      $region17: #{tpu_custom_call.1} parent=5 // pred_check
        %p100 = pneg %p99
      $region18: #{tpu_custom_call.1} parent=5 // pred_check_branch
        %102 = sbr.rel (%p100) target = $region20
      $region19: #{tpu_custom_call.1} parent=5 // pred_region
        _
      $region20: #{tpu_custom_call.1} parent=5 // pred_fallthru
        _
      %p103 = scmp.le.s32.totalorder 1, %s10
      %p104 = scmp.lt.s32.totalorder %s10, 3
      %p105 = pnand %p103, %p104
      %p106 = pneg %p105
      // Predicated region
      $region21: #{tpu_custom_call.1} parent=5 // pred_check
        _
      $region22: #{tpu_custom_call.1} parent=5 // pred_check_branch
        %108 = sbr.rel (%p105) target = $region24
      $region23: #{tpu_custom_call.1} parent=5 // pred_region
        %s109 = ssub.s32 %s10, 1
        %p110 = scmp.lt.s32.totalorder %s19, 0
        %s111 = scalar_select %p110, %s19, 0
        %s112 = smul.addr %s111, 3
        %s113 = smul.addr %s112, 8
        %s114 = scalar_lea.vmem %s0, %s113
        %p115 = pneg %p48
        %p116 = pneg %p45
        %p117 = pneg %p76
        %p118 = pneg %p73
        %s119 = sand.u32 %s63, 1
        %s120 = scalar_lea.sflag [#allocation3], %s119
        %s121 = sand.u32 %s63, 1
        %s122 = smul.addr %s121, 8
        %s123 = scalar_lea.vmem [#allocation2], %s122
        %p124 = scmp.lt.s32.totalorder %s19, 0
        %s125 = scalar_select %p124, %s19, 0
        %s126 = smul.addr %s125, 3
        %s127 = smul.addr %s126, 8
        %s128 = scalar_lea.vmem %s0, %s127
        %s129 = smul.u32 %s20, 8
        %s130 = scalar_lea.vmem %s128, %s129
        %v131 = vld [vmem:[%s130] sm:$0xff]
        %s132 = sadd.s32 %s129, 1
        %s133 = scalar_lea.vmem %s128, %s132
        %v134 = vld [vmem:[%s133] sm:$0xff]
        %s135 = sadd.s32 %s129, 2
        %s136 = scalar_lea.vmem %s128, %s135
        %v137 = vld [vmem:[%s136] sm:$0xff]
        %v138 = vadd.f32 %v131, %v137
        %v139 = vadd.f32 %v134, %v134
        %v140 = vadd.f32 %v138, %v139
        %v141 = vsub.f32 %v137, %v131
        %142 = vrot.lane.b32.xlu0 %v140, 126
        %v143 = vpop.permute.xlu0 %142
        %v144 = vsub.f32 %v143, %v140
        %145 = vrot.lane.b32.xlu0 %v141, 127
        %v146 = vpop.permute.xlu0 %145
        %147 = vrot.lane.b32.xlu0 %v141, 126
        %v148 = vpop.permute.xlu0 %147
        %v149 = vadd.f32 %v141, %v148
        %v150 = vadd.f32 %v146, %v146
        %v151 = vadd.f32 %v149, %v150
        %v152 = vand.u32 2147483647, %v144
        %v153 = vand.u32 2147483647, %v151
        %v154 = vmin.f32 %v152, %v153
        %v155 = vmax.f32 %v152, %v153
        %v156 = vrcp.pop %v155
        %v157 = vmul.f32 %v154, %v156
        %v158 = vmul.f32 %v157, %v157
        %v159 = vmul.f32 0.002785687, %v158
        %v160 = vadd.f32 %v159, -0.015866
        %v161 = vmul.f32 %v160, %v158
        %v162 = vadd.f32 %v161, 0.04247222
        %v163 = vmul.f32 %v162, %v158
        %v164 = vadd.f32 %v163, -0.074975304
        %v165 = vmul.f32 %v164, %v158
        %v166 = vadd.f32 %v165, 0.1064488
        %v167 = vmul.f32 %v166, %v158
        %v168 = vadd.f32 %v167, -0.14207031
        %v169 = vmul.f32 %v168, %v158
        %v170 = vadd.f32 %v169, 0.19993454
        %v171 = vmul.f32 %v170, %v158
        %v172 = vadd.f32 %v171, -0.33333147
        %v173 = vmul.f32 %v172, %v158
        %v174 = vmul.f32 %v173, %v157
        %v175 = vadd.f32 %v174, %v157
        %vm176 = vcmp.gt.f32.partialorder %v153, %v152
        %v177 = vsub.f32 1.5707964, %v175
        %v178 = vsel %vm176, %v177, %v175
        %vm179 = vcmp.lt.f32.partialorder %v144, 0.0
        %v180 = vsub.f32 3.1415927, %v178
        %v181 = vsel %vm179, %v180, %v178
        %vm182 = vcmp.lt.s32.totalorder %v144, 0
        %v183 = vsel %vm182, 3.1415927, 0.0
        %vm184 = vcmp.eq.f32.partialorder %v151, 0.0
        %v185 = vsel %vm184, %v183, %v181
        %vm186 = vcmp.ne.f32.partialorder %v144, %v144
        %vm187 = vcmp.ne.f32.partialorder %v151, %v151
        %vm188 = vmor %vm186, %vm187
        %v189 = vsel %vm188, nan, %v185
        %vm190 = vcmp.lt.f32.partialorder %v144, 0.0
        %v191 = vsel %vm190, 2.3561945, 0.7853982
        %vm192 = vcmp.eq.s32.totalorder %v152, inf
        %vm193 = vcmp.eq.s32.totalorder %v153, inf
        %vm194 = vmand %vm192, %vm193
        %v195 = vsel %vm194, %v191, %v189
        %v196 = vand.u32 2147483647, %v195
        %v197 = vand.u32 %v151, 2147483648
        %v198 = vor.u32 %v196, %v197
        %v199 = vmul.f32 %v198, 57.29578
        %200 = vst [vmem:[%s123] sm:$0xff] %v199
        %s201 = sand.u32 %s63, 1
        %s202 = scalar_lea.sflag [#allocation3], %s201
        %s203 = sand.u32 %s63, 1
        %s204 = smul.addr %s203, 8
        %s205 = scalar_lea.vmem [#allocation2], %s204
        // Predicated region
        $region25: #{tpu_custom_call.1} parent=23 // pred_check
          %p206 = pneg %p73
        $region26: #{tpu_custom_call.1} parent=23 // pred_check_branch
          %208 = sbr.rel (%p206) target = $region28
        $region27: #{tpu_custom_call.1} parent=23 // pred_region
          %s210 = ssub.s32 128, 128
          %211 = vsyncadd %s202, %s210
          %s212 = smul.addr %s19, 2
          %s213 = sadd.s32 %s20, %s212
          %s214 = smul.addr %s213, 128
          %s215 = scalar_lea.hbm %s1, %s214
          %s217 = sshll.u32 %s205, 4
          %s218 = int_to_ptr.vmem [resolvable:$true] %s217
          %220 = dma.vmem_to_hbm [thread:$0]  %s218, 128, %s215, %s202
        $region28: #{tpu_custom_call.1} parent=23 // pred_fallthru
          _
      $region24: #{tpu_custom_call.1} parent=5 // pred_fallthru
        _
      %p221 = scmp.le.s32.totalorder 2, %s10
      // Predicated region
      $region29: #{tpu_custom_call.1} parent=5 // pred_check
        %p222 = pneg %p221
      $region30: #{tpu_custom_call.1} parent=5 // pred_check_branch
        %224 = sbr.rel (%p222) target = $region32
      $region31: #{tpu_custom_call.1} parent=5 // pred_region
        %s225 = ssub.s32 %s10, 2
        // Predicated region
        $region33: #{tpu_custom_call.1} parent=31 // pred_check
          %p226 = pneg %p79
        $region34: #{tpu_custom_call.1} parent=31 // pred_check_branch
          %228 = sbr.rel (%p226) target = $region36
        $region35: #{tpu_custom_call.1} parent=31 // pred_region
          %s229 = sand.u32 %s64, 1
          %s230 = scalar_lea.sflag [#allocation3], %s229
          %s231 = sand.u32 %s64, 1
          %s232 = smul.addr %s231, 8
          %s233 = scalar_lea.vmem [#allocation2], %s232
          %234 = dma.done %s230, 128
        $region36: #{tpu_custom_call.1} parent=31 // pred_fallthru
          _
      $region32: #{tpu_custom_call.1} parent=5 // pred_fallthru
        _
    $region6: #{tpu_custom_call.1} parent=1 // loop_footer
      %s14 = sadd.s32 1, %s10
    $region7: #{tpu_custom_call.1} parent=1 // loop_footer_branch
      %9 = sbr.rel target = $region3
    $region8: #{tpu_custom_call.1} parent=1 // loop_exit
      _
    %235 = vsyncpa [#allocation3], 1
    %s236 = scalar_lea.sflag [#allocation3], 1
    %237 = vsyncpa %s236, 1

</llo_original>
